<compile_context>
chip_gen: v6e
topology: v6e:2x2x1
jax: 0.10.0
libtpu: 0.0.40
codegen_flags: <defaults>
</compile_context>

<pallas_src>
import jax
import jax.numpy as jnp
from jax import lax
from jax.experimental import pallas as pl
from jax.experimental.pallas import tpu as pltpu

_MIN_TILE = 256  # full MXU rows on v6e/v7x, multiple of 128 for v5e


def _round_up(n, m):
    return ((n + m - 1) // m) * m


def _cdiv(a, b):
    return -(-a // b)


def _choose_tile(batch, input_dim, max_rows=8192):
    """Pick a batch tile: ~2 MiB of f32 x per tile, >=2 tiles when possible."""
    target = (2 * 1024 * 1024) // max(4 * input_dim, 1)
    target = max(_MIN_TILE, min(max_rows, target))
    target = _round_up(target, _MIN_TILE)
    if batch < 2 * _MIN_TILE:
        return max(batch, 1)                       # single full-array block
    n_tiles = max(2, _cdiv(batch, target))         # >=2 steps for v7x megacore
    return _round_up(_cdiv(batch, n_tiles), _MIN_TILE)


def _mlp_kernel(x_ref, w1_ref, b1_ref, w2_ref, b2_ref, w3_ref, b3_ref, o_ref):
    # x tile arrives in its native dtype; cast to bf16 on the VPU (hidden
    # under the MXU / DMA of the next tile).
    x = x_ref[...].astype(w1_ref.dtype)

    # fc1 + relu  (MXU, f32 accumulate; bias/relu in f32)
    h1 = jnp.dot(x, w1_ref[...], preferred_element_type=jnp.float32)
    h1 = jnp.maximum(h1 + b1_ref[...], 0.0)

    # fc2 + relu  (MXU, f32 accumulate)
    h2 = jnp.dot(h1.astype(w2_ref.dtype), w2_ref[...],
                 preferred_element_type=jnp.float32)
    h2 = jnp.maximum(h2 + b2_ref[...], 0.0)                  # (TB, 32) f32

    # fc3 (32 -> 1) computed directly as a lane-dense (1, TB) row:
    #   (1, 32) . (TB, 32)^T   (TRANS_B contraction, as in flash-attention qk)
    # so the sigmoid touches dense vregs and the store is an unmasked row.
    logits = lax.dot_general(
        w3_ref[...], h2.astype(w3_ref.dtype),
        dimension_numbers=(((1,), (1,)), ((), ())),
        preferred_element_type=jnp.float32) + b3_ref[...]    # (1, TB) f32

    o_ref[...] = jax.nn.sigmoid(logits)


def supplier_ia_forward(x, params, *, max_block_rows=8192, mxu_dtype=jnp.bfloat16):
    """x: (B, input_dim) f32. Returns (B, 1) f32 probabilities."""
    w1, b1, w2, b2, w3, b3 = params
    B, D = x.shape

    TB = _choose_tile(B, D, max_block_rows)
    n_tiles = _cdiv(B, TB)

    # Resident operands (tiny): MXU weights in bf16, biases in f32.
    w1_in = w1.astype(mxu_dtype)                     # (D, 64)
    w2_in = w2.astype(mxu_dtype)                     # (64, 32)
    w3_row = w3.reshape(1, 32).astype(mxu_dtype)     # (1, 32)
    b1_in = b1.reshape(1, 64).astype(jnp.float32)
    b2_in = b2.reshape(1, 32).astype(jnp.float32)
    b3_s = b3.reshape(1, 1).astype(jnp.float32)

    const = lambda i: (0, 0)

    # VMEM budget: double-buffered x tile + intermediates + resident weights.
    w_bytes = ((w1_in.size + w2_in.size + w3_row.size) * 2
               + (b1_in.size + b2_in.size + b3_s.size) * 4)
    est_vmem = (2 * TB * D * x.dtype.itemsize        # x double buffer (f32)
                + TB * D * 2                         # in-kernel bf16 copy of x
                + 2 * TB * (64 + 32) * 4             # h1/h2 + temporaries
                + 4 * TB * 4                         # output row buffers
                + 2 * w_bytes)
    vmem_limit = int(min(max(2 * est_vmem, 16 << 20), 32 << 20))

    rows_computed = n_tiles * TB                     # includes ragged padding
    flops = 2 * rows_computed * (D * 64 + 64 * 32 + 32)
    bytes_accessed = int(B * D * x.dtype.itemsize + B * 4 + w_bytes)

    out_row = pl.pallas_call(
        _mlp_kernel,
        out_shape=jax.ShapeDtypeStruct((1, B), jnp.float32),
        grid=(n_tiles,),
        in_specs=[
            pl.BlockSpec((TB, D), lambda i: (i, 0)),   # streamed x tile
            pl.BlockSpec(w1_in.shape, const),          # resident weights/biases
            pl.BlockSpec(b1_in.shape, const),
            pl.BlockSpec(w2_in.shape, const),
            pl.BlockSpec(b2_in.shape, const),
            pl.BlockSpec(w3_row.shape, const),
            pl.BlockSpec(b3_s.shape, const),
        ],
        out_specs=pl.BlockSpec((1, TB), lambda i: (0, i)),   # lane-dense row
        compiler_params=pltpu.CompilerParams(
            dimension_semantics=("parallel",),               # 2x on v7x megacore
            vmem_limit_bytes=vmem_limit),
        cost_estimate=pl.CostEstimate(
            flops=int(flops), transcendentals=int(rows_computed),
            bytes_accessed=bytes_accessed),
    )(x, w1_in, b1_in, w2_in, b2_in, w3_row, b3_s)

    return out_row.reshape(B, 1)


def init_params(key, input_dim):
    # Deterministic synthetic init (PyTorch-Linear-style uniform bounds).
    ks = jax.random.split(key, 6)

    def linear(kw, kb, fan_in, fan_out):
        bound = 1.0 / jnp.sqrt(fan_in)
        w = jax.random.uniform(kw, (fan_in, fan_out), jnp.float32, -bound, bound)
        b = jax.random.uniform(kb, (1, fan_out), jnp.float32, -bound, bound)
        return w, b

    w1, b1 = linear(ks[0], ks[1], input_dim, 64)
    w2, b2 = linear(ks[2], ks[3], 64, 32)
    w3, b3 = linear(ks[4], ks[5], 32, 1)
    return (w1, b1, w2, b2, w3, b3)


def reference_forward(x, params, mxu_dtype=jnp.bfloat16):
    # Mirrors the kernel's precision policy (bf16 MXU operands, f32 accum).
    w1, b1, w2, b2, w3, b3 = params
    h1 = jnp.dot(x.astype(mxu_dtype), w1.astype(mxu_dtype),
                 preferred_element_type=jnp.float32)
    h1 = jnp.maximum(h1 + b1, 0.0)
    h2 = jnp.dot(h1.astype(mxu_dtype), w2.astype(mxu_dtype),
                 preferred_element_type=jnp.float32)
    h2 = jnp.maximum(h2 + b2, 0.0)
    logits = jnp.dot(h2.astype(mxu_dtype), w3.astype(mxu_dtype),
                     preferred_element_type=jnp.float32) + b3
    return jax.nn.sigmoid(logits)


def reference_forward_f32(x, params):
    w1, b1, w2, b2, w3, b3 = params
    h1 = jnp.maximum(x @ w1 + b1, 0.0)
    h2 = jnp.maximum(h1 @ w2 + b2, 0.0)
    return jax.nn.sigmoid(h2 @ w3 + b3)


if __name__ == "__main__":
    key = jax.random.PRNGKey(0)
    k_x, k_p, k_x2, k_x3 = jax.random.split(key, 4)

    batch, input_dim = 8, 32
    x = jax.random.normal(k_x, (batch, input_dim), dtype=jnp.float32)
    params = init_params(k_p, input_dim)

    out = jax.block_until_ready(supplier_ia_forward(x, params))
    ref = reference_forward(x, params)
    ref32 = reference_forward_f32(x, params)
    assert out.shape == (batch, 1)
    assert jnp.allclose(out, ref, atol=2e-3, rtol=2e-3)
    assert jnp.allclose(out, ref32, atol=5e-2, rtol=5e-2)

    # Non-multiple-of-8 batch, single full-array block path.
    x2 = jax.random.normal(k_x2, (300, input_dim), dtype=jnp.float32)
    out2 = jax.block_until_ready(supplier_ia_forward(x2, params))
    assert out2.shape == (300, 1)
    assert jnp.allclose(out2, reference_forward(x2, params), atol=2e-3, rtol=2e-3)

    # Multi-tile path with a ragged last tile (exercises the parallel grid /
    # megacore split and the masked boundary writeback).
    x3 = jax.random.normal(k_x3, (600, input_dim), dtype=jnp.float32)
    out3 = jax.block_until_ready(supplier_ia_forward(x3, params))
    assert out3.shape == (600, 1)
    assert jnp.allclose(out3, reference_forward(x3, params), atol=2e-3, rtol=2e-3)

    print("KERNEL_OK")
</pallas_src>

<mosaic_0001>
module attributes {stable_mosaic.version = 11 : i64} {
  func.func @_mlp_kernel(%arg0: i32, %arg1: memref<8x32xf32, #tpu.memory_space<vmem>>, %arg2: memref<32x64xbf16, #tpu.memory_space<vmem>>, %arg3: memref<1x64xf32, #tpu.memory_space<vmem>>, %arg4: memref<64x32xbf16, #tpu.memory_space<vmem>>, %arg5: memref<1x32xf32, #tpu.memory_space<vmem>>, %arg6: memref<1x32xbf16, #tpu.memory_space<vmem>>, %arg7: memref<1x1xf32, #tpu.memory_space<vmem>>, %arg8: memref<1x8xf32, #tpu.memory_space<vmem>>) attributes {dimension_semantics = [#tpu.dimension_semantics<parallel>], iteration_bounds = array<i64: 1>, scalar_prefetch = 0 : i64, scratch_operands = 0 : i64, tpu.core_type = #tpu.core_type<tc>, window_params = [{transform_indices = @transform_0, window_bounds = array<i64: 8, 32>}, {pipeline_mode = #tpu.pipeline_mode<synchronous>, transform_indices = @transform_1, window_bounds = array<i64: 32, 64>}, {pipeline_mode = #tpu.pipeline_mode<synchronous>, transform_indices = @transform_2, window_bounds = array<i64: 1, 64>}, {pipeline_mode = #tpu.pipeline_mode<synchronous>, transform_indices = @transform_3, window_bounds = array<i64: 64, 32>}, {pipeline_mode = #tpu.pipeline_mode<synchronous>, transform_indices = @transform_4, window_bounds = array<i64: 1, 32>}, {pipeline_mode = #tpu.pipeline_mode<synchronous>, transform_indices = @transform_5, window_bounds = array<i64: 1, 32>}, {pipeline_mode = #tpu.pipeline_mode<synchronous>, transform_indices = @transform_6, window_bounds = array<i64: 1, 1>}, {transform_indices = @transform_7, window_bounds = array<i64: 1, 8>}]} {
    %c0 = arith.constant 0 : index
    %c0_0 = arith.constant 0 : index
    %0 = vector.load %arg1[%c0, %c0_0] : memref<8x32xf32, #tpu.memory_space<vmem>>, vector<8x32xf32>
    %1 = arith.truncf %0 : vector<8x32xf32> to vector<8x32xbf16>
    %c0_1 = arith.constant 0 : index
    %c0_2 = arith.constant 0 : index
    %2 = vector.load %arg2[%c0_1, %c0_2] : memref<32x64xbf16, #tpu.memory_space<vmem>>, vector<32x64xbf16>
    %cst = arith.constant dense<0.000000e+00> : vector<8x64xf32>
    %3 = tpu.matmul %1, %2, %cst {dimension_numbers = #tpu.dot_dimension_numbers<[1], [0], [0], [1], [0, 0, 1, 1], [], []>} : vector<8x32xbf16>, vector<32x64xbf16>, vector<8x64xf32> -> vector<8x64xf32>
    %c0_3 = arith.constant 0 : index
    %c0_4 = arith.constant 0 : index
    %4 = vector.load %arg3[%c0_3, %c0_4] : memref<1x64xf32, #tpu.memory_space<vmem>>, vector<1x64xf32>
    %5 = vector.broadcast %4 : vector<1x64xf32> to vector<8x64xf32>
    %6 = arith.addf %3, %5 : vector<8x64xf32>
    %cst_5 = arith.constant 0.000000e+00 : f32
    %7 = vector.broadcast %cst_5 : f32 to vector<8x64xf32>
    %8 = arith.maximumf %6, %7 : vector<8x64xf32>
    %9 = arith.truncf %8 : vector<8x64xf32> to vector<8x64xbf16>
    %c0_6 = arith.constant 0 : index
    %c0_7 = arith.constant 0 : index
    %10 = vector.load %arg4[%c0_6, %c0_7] : memref<64x32xbf16, #tpu.memory_space<vmem>>, vector<64x32xbf16>
    %cst_8 = arith.constant dense<0.000000e+00> : vector<8x32xf32>
    %11 = tpu.matmul %9, %10, %cst_8 {dimension_numbers = #tpu.dot_dimension_numbers<[1], [0], [0], [1], [0, 0, 1, 1], [], []>} : vector<8x64xbf16>, vector<64x32xbf16>, vector<8x32xf32> -> vector<8x32xf32>
    %c0_9 = arith.constant 0 : index
    %c0_10 = arith.constant 0 : index
    %12 = vector.load %arg5[%c0_9, %c0_10] : memref<1x32xf32, #tpu.memory_space<vmem>>, vector<1x32xf32>
    %13 = vector.broadcast %12 : vector<1x32xf32> to vector<8x32xf32>
    %14 = arith.addf %11, %13 : vector<8x32xf32>
    %cst_11 = arith.constant 0.000000e+00 : f32
    %15 = vector.broadcast %cst_11 : f32 to vector<8x32xf32>
    %16 = arith.maximumf %14, %15 : vector<8x32xf32>
    %c0_12 = arith.constant 0 : index
    %c0_13 = arith.constant 0 : index
    %17 = vector.load %arg6[%c0_12, %c0_13] : memref<1x32xbf16, #tpu.memory_space<vmem>>, vector<1x32xbf16>
    %18 = arith.truncf %16 : vector<8x32xf32> to vector<8x32xbf16>
    %cst_14 = arith.constant dense<0.000000e+00> : vector<1x8xf32>
    %19 = tpu.matmul %17, %18, %cst_14 {dimension_numbers = #tpu.dot_dimension_numbers<[1], [1], [0], [0], [0, 0, 1, 0], [], []>} : vector<1x32xbf16>, vector<8x32xbf16>, vector<1x8xf32> -> vector<1x8xf32>
    %c0_15 = arith.constant 0 : index
    %c0_16 = arith.constant 0 : index
    %20 = vector.load %arg7[%c0_15, %c0_16] : memref<1x1xf32, #tpu.memory_space<vmem>>, vector<1x1xf32>
    %21 = vector.broadcast %20 : vector<1x1xf32> to vector<1x8xf32>
    %22 = arith.addf %19, %21 : vector<1x8xf32>
    %23 = arith.negf %22 : vector<1x8xf32>
    %24 = math.exp %23 : vector<1x8xf32>
    %cst_17 = arith.constant 1.000000e+00 : f32
    %25 = vector.broadcast %cst_17 : f32 to vector<1x8xf32>
    %26 = arith.addf %25, %24 : vector<1x8xf32>
    %27 = arith.divf %25, %26 : vector<1x8xf32>
    %c0_18 = arith.constant 0 : index
    %c0_19 = arith.constant 0 : index
    %28 = vector.load %arg8[%c0_18, %c0_19] : memref<1x8xf32, #tpu.memory_space<vmem>>, vector<1x8xf32>
    tpu.vector_store %arg8[%c0_18, %c0_19], %27 {strides = array<i32>} : memref<1x8xf32, #tpu.memory_space<vmem>>, vector<1x8xf32>,
    return
  }
  func.func @transform_0(%arg0: i32) -> (i32, i32) {
    %c0_i32 = arith.constant 0 : i32
    %c0_i32_0 = arith.constant 0 : i32
    return %arg0, %c0_i32 : i32, i32
  }
  func.func @transform_1(%arg0: i32) -> (i32, i32) {
    %c0_i32 = arith.constant 0 : i32
    %c0_i32_0 = arith.constant 0 : i32
    %c0_i32_1 = arith.constant 0 : i32
    return %c0_i32, %c0_i32_0 : i32, i32
  }
  func.func @transform_2(%arg0: i32) -> (i32, i32) {
    %c0_i32 = arith.constant 0 : i32
    %c0_i32_0 = arith.constant 0 : i32
    %c0_i32_1 = arith.constant 0 : i32
    return %c0_i32, %c0_i32_0 : i32, i32
  }
  func.func @transform_3(%arg0: i32) -> (i32, i32) {
    %c0_i32 = arith.constant 0 : i32
    %c0_i32_0 = arith.constant 0 : i32
    %c0_i32_1 = arith.constant 0 : i32
    return %c0_i32, %c0_i32_0 : i32, i32
  }
  func.func @transform_4(%arg0: i32) -> (i32, i32) {
    %c0_i32 = arith.constant 0 : i32
    %c0_i32_0 = arith.constant 0 : i32
    %c0_i32_1 = arith.constant 0 : i32
    return %c0_i32, %c0_i32_0 : i32, i32
  }
  func.func @transform_5(%arg0: i32) -> (i32, i32) {
    %c0_i32 = arith.constant 0 : i32
    %c0_i32_0 = arith.constant 0 : i32
    %c0_i32_1 = arith.constant 0 : i32
    return %c0_i32, %c0_i32_0 : i32, i32
  }
  func.func @transform_6(%arg0: i32) -> (i32, i32) {
    %c0_i32 = arith.constant 0 : i32
    %c0_i32_0 = arith.constant 0 : i32
    %c0_i32_1 = arith.constant 0 : i32
    return %c0_i32, %c0_i32_0 : i32, i32
  }
  func.func @transform_7(%arg0: i32) -> (i32, i32) {
    %c0_i32 = arith.constant 0 : i32
    %c0_i32_0 = arith.constant 0 : i32
    return %c0_i32, %arg0 : i32, i32
  }
}

</mosaic_0001>

<llo_original>
// kernel: tpu_custom_call.1
$region0: #{tpu_custom_call.1}
  #allocation0 [shape = 'u32[]', space=smem, size = 0x4, offset = 0x4, fixed_abs, tag = 'smem constant byte address 0x4 - core index']
  #allocation1 [shape = 'u32[144,128]{1,0:T(1,128)}', space=vmem, size = 0x12000, scoped, tag = 'internal scratch']
  #allocation2 [shape = 'f32[1,1]{1,0:T(1,128)S(1)}', space=vmem, size = 0x200, scoped, tag = 'scoped memory for tpu_custom_call.1']
  %s0 = inlined_call_operand.vmem [shape: f32[8,32], index: 0, kind: input, shape index: {}]
  %s1 = inlined_call_operand.vmem [shape: bf16[32,64], index: 1, kind: input, shape index: {}]
  %s2 = inlined_call_operand.vmem [shape: f32[1,64], index: 2, kind: input, shape index: {}]
  %s3 = inlined_call_operand.vmem [shape: bf16[64,32], index: 3, kind: input, shape index: {}]
  %s4 = inlined_call_operand.vmem [shape: f32[1,32], index: 4, kind: input, shape index: {}]
  %s5 = inlined_call_operand.vmem [shape: bf16[1,32], index: 5, kind: input, shape index: {}]
  %s6 = inlined_call_operand.<no memory space> [shape: f32[1,1], index: 6, kind: input, shape index: {}]
  %s7 = inlined_call_operand.hbm [shape: f32[1,8], index: 7, kind: output, shape index: {}]
  %s8 = sld [smem:[#allocation0]]
  $region38: #{tpu_custom_call.1} parent=0
    _
  %s10 = ssub.s32 1, %s8
  %s11 = scalar_select 0, %s10, %s8
  %v12 = vstv %s6
  %13 = vst [vmem:[#allocation2] sm:$0x1] %v12
  $region1: #{tpu_custom_call.1} parent=0
    #allocation3 [shape = 'u8[512]{0}', space=vmem, size = 0x400, scoped, tag = 'output window, operand 0, single buffered']
    #allocation4 [shape = 's32[1]{0}', space=sflag, size = 0x4, scoped, tag = 'scoped memory for tpu_custom_call.1']
    %14 = vsyncpa [#allocation4], 0
    // Predicated region
    $region2: #{tpu_custom_call.1} parent=1 // pred_check
      _
    $region3: #{tpu_custom_call.1} parent=1 // pred_check_branch
      %16 = sbr.rel (0) target = $region5
    $region4: #{tpu_custom_call.1} parent=1 // pred_region
      _
    $region5: #{tpu_custom_call.1} parent=1 // pred_fallthru
      _
    // Predicated region
    $region6: #{tpu_custom_call.1} parent=1 // pred_check
      _
    $region7: #{tpu_custom_call.1} parent=1 // pred_check_branch
      %18 = sbr.rel (0) target = $region9
    $region8: #{tpu_custom_call.1} parent=1 // pred_region
      _
    $region9: #{tpu_custom_call.1} parent=1 // pred_fallthru
      _
    // Predicated region
    $region10: #{tpu_custom_call.1} parent=1 // pred_check
      _
    $region11: #{tpu_custom_call.1} parent=1 // pred_check_branch
      %20 = sbr.rel (0) target = $region13
    $region12: #{tpu_custom_call.1} parent=1 // pred_region
      _
    $region13: #{tpu_custom_call.1} parent=1 // pred_fallthru
      _
    // Predicated region
    $region14: #{tpu_custom_call.1} parent=1 // pred_check
      _
    $region15: #{tpu_custom_call.1} parent=1 // pred_check_branch
      %22 = sbr.rel (0) target = $region17
    $region16: #{tpu_custom_call.1} parent=1 // pred_region
      _
    $region17: #{tpu_custom_call.1} parent=1 // pred_fallthru
      _
    // Predicated region
    $region18: #{tpu_custom_call.1} parent=1 // pred_check
      _
    $region19: #{tpu_custom_call.1} parent=1 // pred_check_branch
      %24 = sbr.rel (0) target = $region21
    $region20: #{tpu_custom_call.1} parent=1 // pred_region
      _
    $region21: #{tpu_custom_call.1} parent=1 // pred_fallthru
      _
    // Predicated region
    $region22: #{tpu_custom_call.1} parent=1 // pred_check
      _
    $region23: #{tpu_custom_call.1} parent=1 // pred_check_branch
      %26 = sbr.rel (0) target = $region25
    $region24: #{tpu_custom_call.1} parent=1 // pred_region
      _
    $region25: #{tpu_custom_call.1} parent=1 // pred_fallthru
      _
    // Predicated region
    $region26: #{tpu_custom_call.1} parent=1 // pred_check
      _
    $region27: #{tpu_custom_call.1} parent=1 // pred_check_branch
      %28 = sbr.rel (0) target = $region29
    $region28: #{tpu_custom_call.1} parent=1 // pred_region
      _
    $region29: #{tpu_custom_call.1} parent=1 // pred_fallthru
      _
    %v30 = vld [vmem:[%s0] sm:$0xff]
    %v31 = vpack.c.bf16 %v30, %v30
    %v32 = vld [vmem:[%s1] sm:$0xf]
    %v33 = vld [vmem:[%s1 + $0x4] sm:$0xf]
    %v34 = vld [vmem:[%s1 + $0x8] sm:$0xf]
    %v35 = vld [vmem:[%s1 + $0xc] sm:$0xf]
    %v36 = vld [vmem:[%s2] sm:$0x1]
    %v38 = vlaneseq
    %v39 = vshrl.u32 %v38, 7
    %v40 = vsub.s32 0, %v39
    %v41 = vrot.slane %v36, %v40
    %v47 = vunpack.c.l.b16 %v32
    %v48 = vunpack.c.l.b16 %v33
    %v49 = vunpack.c.l.b16 %v34
    %v50 = vunpack.c.l.b16 %v35
    %v51 = vpack.c.b16 %v48, %v47
    %v52 = vpack.c.b16 %v50, %v49
    %vm55 = vcmask 261120
    %v57 = vsel %vm55, %v31, 0
    %59 = vmatprep.subr.bf16.mxu0 0
    %60 = vmatpush1.bf16.msra.mxu0 0
    %61 = vmatprep.subr.bf16.mxu0 0
    %62 = vmatpush1.bf16.msra.mxu0 0
    %63 = vmatprep.subr.bf16.mxu0 0
    %64 = vmatpush1.bf16.msra.mxu0 0
    %65 = vmatprep.subr.bf16.mxu0 0
    %66 = vmatpush1.bf16.msra.mxu0 0
    %67 = vmatprep.subr.bf16.mxu0 0
    %68 = vmatpush1.bf16.msra.mxu0 0
    %69 = vmatprep.subr.bf16.mxu0 0
    %70 = vmatpush1.bf16.msra.mxu0 0
    %71 = vmatprep.subr.bf16.mxu0 0
    %72 = vmatpush1.bf16.msra.mxu0 %v52
    %73 = vmatprep.subr.bf16.mxu0 0
    %74 = vmatpush1.bf16.msra.mxu0 %v51
    %75 = vmatprep.subr.bf16.mxu0 0
    %76 = vmatpush2.bf16.msra.mxu0 0
    %77 = vmatprep.subr.bf16.mxu0 0
    %78 = vmatpush2.bf16.msra.mxu0 0
    %79 = vmatprep.subr.bf16.mxu0 0
    %80 = vmatpush2.bf16.msra.mxu0 0
    %81 = vmatprep.subr.bf16.mxu0 0
    %82 = vmatpush2.bf16.msra.mxu0 0
    %83 = vmatprep.subr.bf16.mxu0 0
    %84 = vmatpush2.bf16.msra.mxu0 0
    %85 = vmatprep.subr.bf16.mxu0 0
    %86 = vmatpush2.bf16.msra.mxu0 0
    %87 = vmatprep.subr.bf16.mxu0 0
    %88 = vmatpush2.bf16.msra.mxu0 0
    %89 = vmatprep.subr.bf16.mxu0 0
    %90 = vmatpush2.bf16.msra.mxu0 0
    %91 = vmatprep.mubr.bf16.mxu0 0
    %92 = vmatmul.mubr.bf16.gmra.mxu0 %v57
    %v93 = vpop.f32.mrf.mxu0
    %v94 = vadd.f32 %v41, %v93
    %v95 = vpop.f32.mrf.mxu0
    %v96 = vpop.f32.mrf.mxu0
    %v97 = vpop.f32.mrf.mxu0
    %98 = vdwg.mxu0
    %v99 = vmax.f32 %v94, 0.0
    %v100 = vpack.c.bf16 %v99, %v99
    %v101 = vld [vmem:[%s3] sm:$0xf]
    %v102 = vld [vmem:[%s3 + $0x4] sm:$0xf]
    %v103 = vld [vmem:[%s3 + $0x8] sm:$0xf]
    %v104 = vld [vmem:[%s3 + $0xc] sm:$0xf]
    %v105 = vld [vmem:[%s3 + $0x10] sm:$0xf]
    %v106 = vld [vmem:[%s3 + $0x14] sm:$0xf]
    %v107 = vld [vmem:[%s3 + $0x18] sm:$0xf]
    %v108 = vld [vmem:[%s3 + $0x1c] sm:$0xf]
    %v109 = vld [vmem:[%s4] sm:$0x1]
    %v111 = vlaneseq
    %v112 = vshrl.u32 %v111, 7
    %v113 = vsub.s32 0, %v112
    %v114 = vrot.slane %v109, %v113
    %v124 = vunpack.c.l.b16 %v101
    %v125 = vunpack.c.l.b16 %v102
    %v126 = vunpack.c.l.b16 %v103
    %v127 = vunpack.c.l.b16 %v104
    %v128 = vunpack.c.l.b16 %v105
    %v129 = vunpack.c.l.b16 %v106
    %v130 = vunpack.c.l.b16 %v107
    %v131 = vunpack.c.l.b16 %v108
    %v132 = vpack.c.b16 %v125, %v124
    %v133 = vpack.c.b16 %v127, %v126
    %v134 = vpack.c.b16 %v129, %v128
    %v135 = vpack.c.b16 %v131, %v130
    %vm140 = vcmask 523264
    %v142 = vsel %vm140, %v100, 0
    %144 = vmatprep.subr.bf16.mxu0 0
    %145 = vmatpush1.bf16.msra.mxu0 0
    %146 = vmatprep.subr.bf16.mxu0 0
    %147 = vmatpush1.bf16.msra.mxu0 0
    %148 = vmatprep.subr.bf16.mxu0 0
    %149 = vmatpush1.bf16.msra.mxu0 0
    %150 = vmatprep.subr.bf16.mxu0 0
    %151 = vmatpush1.bf16.msra.mxu0 0
    %152 = vmatprep.subr.bf16.mxu0 0
    %153 = vmatpush1.bf16.msra.mxu0 %v135
    %154 = vmatprep.subr.bf16.mxu0 0
    %155 = vmatpush1.bf16.msra.mxu0 %v134
    %156 = vmatprep.subr.bf16.mxu0 0
    %157 = vmatpush1.bf16.msra.mxu0 %v133
    %158 = vmatprep.subr.bf16.mxu0 0
    %159 = vmatpush1.bf16.msra.mxu0 %v132
    %160 = vmatprep.subr.bf16.mxu0 0
    %161 = vmatpush2.bf16.msra.mxu0 0
    %162 = vmatprep.subr.bf16.mxu0 0
    %163 = vmatpush2.bf16.msra.mxu0 0
    %164 = vmatprep.subr.bf16.mxu0 0
    %165 = vmatpush2.bf16.msra.mxu0 0
    %166 = vmatprep.subr.bf16.mxu0 0
    %167 = vmatpush2.bf16.msra.mxu0 0
    %168 = vmatprep.subr.bf16.mxu0 0
    %169 = vmatpush2.bf16.msra.mxu0 0
    %170 = vmatprep.subr.bf16.mxu0 0
    %171 = vmatpush2.bf16.msra.mxu0 0
    %172 = vmatprep.subr.bf16.mxu0 0
    %173 = vmatpush2.bf16.msra.mxu0 0
    %174 = vmatprep.subr.bf16.mxu0 0
    %175 = vmatpush2.bf16.msra.mxu0 0
    %176 = vmatprep.mubr.bf16.mxu0 0
    %177 = vmatmul.mubr.bf16.gmra.mxu0 %v142
    %v178 = vpop.f32.mrf.mxu0
    %v179 = vadd.f32 %v114, %v178
    %v180 = vpop.f32.mrf.mxu0
    %v181 = vpop.f32.mrf.mxu0
    %v182 = vpop.f32.mrf.mxu0
    %183 = vdwg.mxu0
    %v184 = vmax.f32 %v179, 0.0
    %v185 = vld [vmem:[%s5] sm:$0x1]
    %v186 = vpack.c.bf16 %v184, %v184
    %v187 = vld [vmem:[#allocation2] sm:$0x1]
    %189 = vset.pattern.permute.xlu0 0
    %190 = vperm.xlu0 %189, %v187
    %v191 = vpop.permute.xlu0 %190
    %v193 = vlaneseq
    %v194 = vshrl.u32 %v193, 7
    %v195 = vsub.s32 0, %v194
    %v196 = vrot.slane %v191, %v195
    %v198 = vsel %vm55, %v185, 0
    %v201 = vsel %vm55, %v186, 0
    %203 = vmatprep.subr.bf16.mxu0 0
    %204 = vmatpush1.bf16.xpose.msra.mxu0 0
    %205 = vmatprep.subr.bf16.mxu0 0
    %206 = vmatpush1.bf16.xpose.msra.mxu0 0
    %207 = vmatprep.subr.bf16.mxu0 0
    %208 = vmatpush1.bf16.xpose.msra.mxu0 0
    %209 = vmatprep.subr.bf16.mxu0 0
    %210 = vmatpush1.bf16.xpose.msra.mxu0 0
    %211 = vmatprep.subr.bf16.mxu0 0
    %212 = vmatpush1.bf16.xpose.msra.mxu0 0
    %213 = vmatprep.subr.bf16.mxu0 0
    %214 = vmatpush1.bf16.xpose.msra.mxu0 0
    %215 = vmatprep.subr.bf16.mxu0 0
    %216 = vmatpush1.bf16.xpose.msra.mxu0 0
    %217 = vmatprep.subr.bf16.mxu0 0
    %218 = vmatpush1.bf16.xpose.msra.mxu0 %v201
    %219 = vmatprep.subr.bf16.mxu0 0
    %220 = vmatpush2.bf16.xpose.msra.mxu0 0
    %221 = vmatprep.subr.bf16.mxu0 0
    %222 = vmatpush2.bf16.xpose.msra.mxu0 0
    %223 = vmatprep.subr.bf16.mxu0 0
    %224 = vmatpush2.bf16.xpose.msra.mxu0 0
    %225 = vmatprep.subr.bf16.mxu0 0
    %226 = vmatpush2.bf16.xpose.msra.mxu0 0
    %227 = vmatprep.subr.bf16.mxu0 0
    %228 = vmatpush2.bf16.xpose.msra.mxu0 0
    %229 = vmatprep.subr.bf16.mxu0 0
    %230 = vmatpush2.bf16.xpose.msra.mxu0 0
    %231 = vmatprep.subr.bf16.mxu0 0
    %232 = vmatpush2.bf16.xpose.msra.mxu0 0
    %233 = vmatprep.subr.bf16.mxu0 0
    %234 = vmatpush2.bf16.xpose.msra.mxu0 0
    %235 = vmatprep.mubr.bf16.mxu0 0
    %236 = vmatmul.mubr.bf16.gmra.mxu0 %v198
    %v237 = vpop.f32.mrf.mxu0
    %v238 = vadd.f32 %v196, %v237
    %v239 = vpop.f32.mrf.mxu0
    %v240 = vpop.f32.mrf.mxu0
    %v241 = vpop.f32.mrf.mxu0
    %242 = vdwg.mxu0
    %v243 = vxor.u32 %v238, 2147483648
    %v244 = vmul.f32 %v243, 1.442695
    %v245 = vpow.pop %v244
    %v246 = vadd.f32 %v245, 1.0
    %v247 = vrcp.pop %v246
    %v248 = vmul.f32 1.0, %v247
    %vm249 = vcmask 57344
    %250 = vst.msk [vmem:[#allocation3] sm:$0x1] %vm249, %v248
    // Predicated region
    $region30: #{tpu_custom_call.1} parent=1 // pred_check
      _
    $region31: #{tpu_custom_call.1} parent=1 // pred_check_branch
      %252 = sbr.rel (0) target = $region33
    $region32: #{tpu_custom_call.1} parent=1 // pred_region
      %s254 = ssub.s32 16, 16
      %255 = vsyncadd [#allocation4], %s254
      %s257 = sshll.u32 [#allocation3], 4
      %s258 = int_to_ptr.vmem [resolvable:$true] %s257
      %260 = dma.vmem_to_hbm [thread:$0]  %s258, 16, %s7, [#allocation4]
    $region33: #{tpu_custom_call.1} parent=1 // pred_fallthru
      _
    // Predicated region
    $region34: #{tpu_custom_call.1} parent=1 // pred_check
      _
    $region35: #{tpu_custom_call.1} parent=1 // pred_check_branch
      %262 = sbr.rel (0) target = $region37
    $region36: #{tpu_custom_call.1} parent=1 // pred_region
      %263 = dma.done [#allocation4], 16
    $region37: #{tpu_custom_call.1} parent=1 // pred_fallthru
      _
    %264 = vsyncpa [#allocation4], 1

</llo_original>
